<compile_context>
chip_gen: v6e
topology: v6e:2x2x1
jax: 0.10.0
libtpu: 0.0.40
codegen_flags: <defaults>
</compile_context>

<pallas_src>
import jax
import jax.numpy as jnp
from jax.experimental import pallas as pl
from jax.experimental.pallas import tpu as pltpu


# ---------------------------------------------------------------------------
# Kernel: one grid step == one RNN timestep.
# ---------------------------------------------------------------------------
def rnn_seq_kernel(x_ref, h0_ref, wxh_ref, whh_ref, bh_ref,
                   wxo_ref, who_ref, bo_ref,
                   out_ref, h_ref):
    t = pl.program_id(0)
    T = pl.num_programs(0)

    # Load the caller-provided initial hidden state once.  h_ref has a
    # constant index_map, so it stays resident in VMEM across all grid steps
    # and doubles as the recurrent carry.
    @pl.when(t == 0)
    def _():
        h_ref[...] = h0_ref[...]

    x = x_ref[0]          # [B, I]  this timestep's input slice
    h = h_ref[...]        # [B, H]  previous hidden state (VMEM-resident)

    # i2h head: hidden' = tanh([x, h] @ W_i2h.T + b_i2h)
    h_new = jnp.tanh(
        jnp.dot(x, wxh_ref[...], preferred_element_type=jnp.float32)
        + jnp.dot(h, whh_ref[...], preferred_element_type=jnp.float32)
        + bh_ref[...])
    h_ref[...] = h_new

    # i2o head + log_softmax: only the last step's output is ever used by the
    # PyTorch train/test loops, so skip it entirely on earlier steps.
    # NOTE: uses the OLD hidden `h` (matches `combined` in PyTorch forward).
    @pl.when(t == T - 1)
    def _():
        logits = (jnp.dot(x, wxo_ref[...], preferred_element_type=jnp.float32)
                  + jnp.dot(h, who_ref[...], preferred_element_type=jnp.float32)
                  + bo_ref[...])                                   # [B, O]
        m = jnp.max(logits, axis=1, keepdims=True)
        shifted = logits - m
        lse = jnp.log(jnp.sum(jnp.exp(shifted), axis=1, keepdims=True))
        out_ref[...] = shifted - lse                               # log_softmax


# ---------------------------------------------------------------------------
# One-time parameter preparation (hoisted out of the per-call hot path).
# ---------------------------------------------------------------------------
def prepare_params(w_i2h, b_i2h, w_i2o, b_i2o, input_size):
    """PyTorch nn.Linear layout -> split, pre-transposed kernel layout.

    w_i2h: [H, I+H], w_i2o: [O, I+H]  (y = x @ W.T + b)
    Returns wxh:[I,H], whh:[H,H], bh:[1,H], wxo:[I,O], who:[H,O], bo:[1,O].
    """
    I = input_size
    wxh = jnp.transpose(w_i2h[:, :I])     # [I, H]
    whh = jnp.transpose(w_i2h[:, I:])     # [H, H]
    wxo = jnp.transpose(w_i2o[:, :I])     # [I, O]
    who = jnp.transpose(w_i2o[:, I:])     # [H, O]
    bh = b_i2h.reshape(1, -1)             # [1, H]
    bo = b_i2o.reshape(1, -1)             # [1, O]
    return wxh, whh, bh, wxo, who, bo


# ---------------------------------------------------------------------------
# Wrapper: run the whole sequence in one pallas_call.
# ---------------------------------------------------------------------------
@jax.jit
def rnn_sequence(x_seq, h0, wxh, whh, bh, wxo, who, bo):
    """x_seq: [T, B, I], h0: [B, H]. Returns (final output [B,O], final hidden [B,H])."""
    T, B, I = x_seq.shape
    H = h0.shape[1]
    O = wxo.shape[1]

    grid_spec = pltpu.PrefetchScalarGridSpec(
        num_scalar_prefetch=0,
        grid=(T,),
        in_specs=[
            pl.BlockSpec((1, B, I), lambda t: (t, 0, 0)),   # stream x[t]
            pl.BlockSpec((B, H), lambda t: (0, 0)),         # h0        (resident)
            pl.BlockSpec((I, H), lambda t: (0, 0)),         # W_x->h    (resident)
            pl.BlockSpec((H, H), lambda t: (0, 0)),         # W_h->h    (resident)
            pl.BlockSpec((1, H), lambda t: (0, 0)),         # b_i2h     (resident)
            pl.BlockSpec((I, O), lambda t: (0, 0)),         # W_x->o    (resident)
            pl.BlockSpec((H, O), lambda t: (0, 0)),         # W_h->o    (resident)
            pl.BlockSpec((1, O), lambda t: (0, 0)),         # b_i2o     (resident)
        ],
        out_specs=(
            pl.BlockSpec((B, O), lambda t: (0, 0)),         # final log-softmax
            pl.BlockSpec((B, H), lambda t: (0, 0)),         # carried / final hidden
        ),
    )

    out, h_final = pl.pallas_call(
        rnn_seq_kernel,
        grid_spec=grid_spec,
        out_shape=(jax.ShapeDtypeStruct((B, O), jnp.float32),
                   jax.ShapeDtypeStruct((B, H), jnp.float32)),
        compiler_params=pltpu.CompilerParams(
            dimension_semantics=("arbitrary",)),             # recurrence: sequential in time
    )(x_seq, h0, wxh, whh, bh, wxo, who, bo)
    return out, h_final


# ---------------------------------------------------------------------------
# Pure-JAX reference (direct transcription of the PyTorch forward + loop).
# ---------------------------------------------------------------------------
def rnn_ref(x_seq, h0, w_i2h, b_i2h, w_i2o, b_i2o):
    h = h0
    out = None
    for t in range(x_seq.shape[0]):
        combined = jnp.concatenate([x_seq[t], h], axis=1)
        out = jax.nn.log_softmax(combined @ w_i2o.T + b_i2o, axis=1)
        h = jnp.tanh(combined @ w_i2h.T + b_i2h)
    return out, h


def init_params(key, input_size, hidden_size, output_size):
    k1, k2, k3, k4 = jax.random.split(key, 4)
    fan_in = input_size + hidden_size
    bound = 1.0 / jnp.sqrt(fan_in)
    w_i2h = jax.random.uniform(k1, (hidden_size, fan_in), jnp.float32, -bound, bound)
    b_i2h = jax.random.uniform(k2, (hidden_size,), jnp.float32, -bound, bound)
    w_i2o = jax.random.uniform(k3, (output_size, fan_in), jnp.float32, -bound, bound)
    b_i2o = jax.random.uniform(k4, (output_size,), jnp.float32, -bound, bound)
    return w_i2h, b_i2h, w_i2o, b_i2o


if __name__ == "__main__":
    T, B, INPUT, HIDDEN, OUTPUT = 8, 2, 16, 32, 8
    key = jax.random.PRNGKey(0)
    kx, kp = jax.random.split(key)

    x_seq = jax.random.normal(kx, (T, B, INPUT), jnp.float32)
    h0 = jnp.zeros((B, HIDDEN), jnp.float32)          # initHidden()
    w_i2h, b_i2h, w_i2o, b_i2o = init_params(kp, INPUT, HIDDEN, OUTPUT)

    # One-time weight prep (split + transpose), done outside the hot path.
    wxh, whh, bh, wxo, who, bo = prepare_params(w_i2h, b_i2h, w_i2o, b_i2o, INPUT)

    out, h_final = rnn_sequence(x_seq, h0, wxh, whh, bh, wxo, who, bo)
    jax.block_until_ready((out, h_final))

    out_ref, h_ref = rnn_ref(x_seq, h0, w_i2h, b_i2h, w_i2o, b_i2o)
    assert jnp.allclose(out, out_ref, atol=1e-4), "output mismatch"
    assert jnp.allclose(h_final, h_ref, atol=1e-4), "hidden mismatch"

    # TODO(synk): NLLLoss / Adam / backward from ModelBase.train are training
    # utilities and are not implemented (forward recurrence only).
    print("KERNEL_OK")
</pallas_src>

<mosaic_0001>
module attributes {stable_mosaic.version = 11 : i64} {
  func.func @rnn_seq_kernel(%arg0: i32, %arg1: memref<1x2x16xf32, #tpu.memory_space<vmem>>, %arg2: memref<2x32xf32, #tpu.memory_space<vmem>>, %arg3: memref<16x32xf32, #tpu.memory_space<vmem>>, %arg4: memref<32x32xf32, #tpu.memory_space<vmem>>, %arg5: memref<1x32xf32, #tpu.memory_space<vmem>>, %arg6: memref<16x8xf32, #tpu.memory_space<vmem>>, %arg7: memref<32x8xf32, #tpu.memory_space<vmem>>, %arg8: memref<1x8xf32, #tpu.memory_space<vmem>>, %arg9: memref<2x8xf32, #tpu.memory_space<vmem>>, %arg10: memref<2x32xf32, #tpu.memory_space<vmem>>) attributes {dimension_semantics = [#tpu.dimension_semantics<arbitrary>], iteration_bounds = array<i64: 8>, scalar_prefetch = 0 : i64, scratch_operands = 0 : i64, tpu.core_type = #tpu.core_type<tc>, window_params = [{transform_indices = @transform_0, window_bounds = array<i64: 1, 2, 16>}, {pipeline_mode = #tpu.pipeline_mode<synchronous>, transform_indices = @transform_1, window_bounds = array<i64: 2, 32>}, {pipeline_mode = #tpu.pipeline_mode<synchronous>, transform_indices = @transform_2, window_bounds = array<i64: 16, 32>}, {pipeline_mode = #tpu.pipeline_mode<synchronous>, transform_indices = @transform_3, window_bounds = array<i64: 32, 32>}, {pipeline_mode = #tpu.pipeline_mode<synchronous>, transform_indices = @transform_4, window_bounds = array<i64: 1, 32>}, {pipeline_mode = #tpu.pipeline_mode<synchronous>, transform_indices = @transform_5, window_bounds = array<i64: 16, 8>}, {pipeline_mode = #tpu.pipeline_mode<synchronous>, transform_indices = @transform_6, window_bounds = array<i64: 32, 8>}, {pipeline_mode = #tpu.pipeline_mode<synchronous>, transform_indices = @transform_7, window_bounds = array<i64: 1, 8>}, {pipeline_mode = #tpu.pipeline_mode<synchronous>, transform_indices = @transform_8, window_bounds = array<i64: 2, 8>}, {pipeline_mode = #tpu.pipeline_mode<synchronous>, transform_indices = @transform_9, window_bounds = array<i64: 2, 32>}]} {
    %c0_i32 = arith.constant 0 : i32
    %0 = arith.cmpi eq, %arg0, %c0_i32 : i32
    %1 = arith.extui %0 : i1 to i32
    %c0_i32_0 = arith.constant 0 : i32
    %2 = arith.cmpi ne, %1, %c0_i32_0 : i32
    scf.if %2 {
      %c0_15 = arith.constant 0 : index
      %c0_16 = arith.constant 0 : index
      %19 = vector.load %arg2[%c0_15, %c0_16] : memref<2x32xf32, #tpu.memory_space<vmem>>, vector<2x32xf32>
      %c0_17 = arith.constant 0 : index
      %c0_18 = arith.constant 0 : index
      %20 = vector.load %arg10[%c0_17, %c0_18] : memref<2x32xf32, #tpu.memory_space<vmem>>, vector<2x32xf32>
      tpu.vector_store %arg10[%c0_17, %c0_18], %19 {strides = array<i32>} : memref<2x32xf32, #tpu.memory_space<vmem>>, vector<2x32xf32>,
    } else {
    }
    %c0 = arith.constant 0 : index
    %c0_1 = arith.constant 0 : index
    %c0_2 = arith.constant 0 : index
    %3 = vector.load %arg1[%c0, %c0_1, %c0_2] : memref<1x2x16xf32, #tpu.memory_space<vmem>>, vector<1x2x16xf32>
    %4 = vector.shape_cast %3 : vector<1x2x16xf32> to vector<2x16xf32>
    %c0_3 = arith.constant 0 : index
    %c0_4 = arith.constant 0 : index
    %5 = vector.load %arg10[%c0_3, %c0_4] : memref<2x32xf32, #tpu.memory_space<vmem>>, vector<2x32xf32>
    %c0_5 = arith.constant 0 : index
    %c0_6 = arith.constant 0 : index
    %6 = vector.load %arg3[%c0_5, %c0_6] : memref<16x32xf32, #tpu.memory_space<vmem>>, vector<16x32xf32>
    %cst = arith.constant dense<0.000000e+00> : vector<2x32xf32>
    %7 = tpu.matmul %4, %6, %cst {dimension_numbers = #tpu.dot_dimension_numbers<[1], [0], [0], [1], [0, 0, 1, 1], [], []>} : vector<2x16xf32>, vector<16x32xf32>, vector<2x32xf32> -> vector<2x32xf32>
    %c0_7 = arith.constant 0 : index
    %c0_8 = arith.constant 0 : index
    %8 = vector.load %arg4[%c0_7, %c0_8] : memref<32x32xf32, #tpu.memory_space<vmem>>, vector<32x32xf32>
    %cst_9 = arith.constant dense<0.000000e+00> : vector<2x32xf32>
    %9 = tpu.matmul %5, %8, %cst_9 {dimension_numbers = #tpu.dot_dimension_numbers<[1], [0], [0], [1], [0, 0, 1, 1], [], []>} : vector<2x32xf32>, vector<32x32xf32>, vector<2x32xf32> -> vector<2x32xf32>
    %10 = arith.addf %7, %9 : vector<2x32xf32>
    %c0_10 = arith.constant 0 : index
    %c0_11 = arith.constant 0 : index
    %11 = vector.load %arg5[%c0_10, %c0_11] : memref<1x32xf32, #tpu.memory_space<vmem>>, vector<1x32xf32>
    %12 = vector.broadcast %11 : vector<1x32xf32> to vector<2x32xf32>
    %13 = arith.addf %10, %12 : vector<2x32xf32>
    %14 = math.tanh %13 : vector<2x32xf32>
    %c0_12 = arith.constant 0 : index
    %c0_13 = arith.constant 0 : index
    %15 = vector.load %arg10[%c0_12, %c0_13] : memref<2x32xf32, #tpu.memory_space<vmem>>, vector<2x32xf32>
    tpu.vector_store %arg10[%c0_12, %c0_13], %14 {strides = array<i32>} : memref<2x32xf32, #tpu.memory_space<vmem>>, vector<2x32xf32>,
    %c7_i32 = arith.constant 7 : i32
    %16 = arith.cmpi eq, %arg0, %c7_i32 : i32
    %17 = arith.extui %16 : i1 to i32
    %c0_i32_14 = arith.constant 0 : i32
    %18 = arith.cmpi ne, %17, %c0_i32_14 : i32
    scf.if %18 {
      %c0_15 = arith.constant 0 : index
      %c0_16 = arith.constant 0 : index
      %19 = vector.load %arg6[%c0_15, %c0_16] : memref<16x8xf32, #tpu.memory_space<vmem>>, vector<16x8xf32>
      %cst_17 = arith.constant dense<0.000000e+00> : vector<2x8xf32>
      %20 = tpu.matmul %4, %19, %cst_17 {dimension_numbers = #tpu.dot_dimension_numbers<[1], [0], [0], [1], [0, 0, 1, 1], [], []>} : vector<2x16xf32>, vector<16x8xf32>, vector<2x8xf32> -> vector<2x8xf32>
      %c0_18 = arith.constant 0 : index
      %c0_19 = arith.constant 0 : index
      %21 = vector.load %arg7[%c0_18, %c0_19] : memref<32x8xf32, #tpu.memory_space<vmem>>, vector<32x8xf32>
      %cst_20 = arith.constant dense<0.000000e+00> : vector<2x8xf32>
      %22 = tpu.matmul %5, %21, %cst_20 {dimension_numbers = #tpu.dot_dimension_numbers<[1], [0], [0], [1], [0, 0, 1, 1], [], []>} : vector<2x32xf32>, vector<32x8xf32>, vector<2x8xf32> -> vector<2x8xf32>
      %23 = arith.addf %20, %22 : vector<2x8xf32>
      %c0_21 = arith.constant 0 : index
      %c0_22 = arith.constant 0 : index
      %24 = vector.load %arg8[%c0_21, %c0_22] : memref<1x8xf32, #tpu.memory_space<vmem>>, vector<1x8xf32>
      %25 = vector.broadcast %24 : vector<1x8xf32> to vector<2x8xf32>
      %26 = arith.addf %23, %25 : vector<2x8xf32>
      %cst_23 = arith.constant dense<0xFF800000> : vector<2xf32>
      %27 = vector.multi_reduction <maximumf>, %26, %cst_23 [1] : vector<2x8xf32> to vector<2xf32>
      %28 = vector.shape_cast %27 : vector<2xf32> to vector<2x1xf32>
      %29 = vector.broadcast %28 : vector<2x1xf32> to vector<2x8xf32>
      %30 = arith.subf %26, %29 : vector<2x8xf32>
      %31 = math.exp %30 : vector<2x8xf32>
      %cst_24 = arith.constant dense<0.000000e+00> : vector<2xf32>
      %32 = vector.multi_reduction <add>, %31, %cst_24 [1] : vector<2x8xf32> to vector<2xf32>
      %33 = vector.shape_cast %32 : vector<2xf32> to vector<2x1xf32>
      %34 = math.log %33 : vector<2x1xf32>
      %35 = vector.broadcast %34 : vector<2x1xf32> to vector<2x8xf32>
      %36 = arith.subf %30, %35 : vector<2x8xf32>
      %c0_25 = arith.constant 0 : index
      %c0_26 = arith.constant 0 : index
      %37 = vector.load %arg9[%c0_25, %c0_26] : memref<2x8xf32, #tpu.memory_space<vmem>>, vector<2x8xf32>
      tpu.vector_store %arg9[%c0_25, %c0_26], %36 {strides = array<i32>} : memref<2x8xf32, #tpu.memory_space<vmem>>, vector<2x8xf32>,
    } else {
    }
    return
  }
  func.func @transform_0(%arg0: i32) -> (i32, i32, i32) {
    %c0_i32 = arith.constant 0 : i32
    %c0_i32_0 = arith.constant 0 : i32
    %c0_i32_1 = arith.constant 0 : i32
    return %arg0, %c0_i32, %c0_i32_0 : i32, i32, i32
  }
  func.func @transform_1(%arg0: i32) -> (i32, i32) {
    %c0_i32 = arith.constant 0 : i32
    %c0_i32_0 = arith.constant 0 : i32
    %c0_i32_1 = arith.constant 0 : i32
    return %c0_i32, %c0_i32_0 : i32, i32
  }
  func.func @transform_2(%arg0: i32) -> (i32, i32) {
    %c0_i32 = arith.constant 0 : i32
    %c0_i32_0 = arith.constant 0 : i32
    %c0_i32_1 = arith.constant 0 : i32
    return %c0_i32, %c0_i32_0 : i32, i32
  }
  func.func @transform_3(%arg0: i32) -> (i32, i32) {
    %c0_i32 = arith.constant 0 : i32
    %c0_i32_0 = arith.constant 0 : i32
    %c0_i32_1 = arith.constant 0 : i32
    return %c0_i32, %c0_i32_0 : i32, i32
  }
  func.func @transform_4(%arg0: i32) -> (i32, i32) {
    %c0_i32 = arith.constant 0 : i32
    %c0_i32_0 = arith.constant 0 : i32
    %c0_i32_1 = arith.constant 0 : i32
    return %c0_i32, %c0_i32_0 : i32, i32
  }
  func.func @transform_5(%arg0: i32) -> (i32, i32) {
    %c0_i32 = arith.constant 0 : i32
    %c0_i32_0 = arith.constant 0 : i32
    %c0_i32_1 = arith.constant 0 : i32
    return %c0_i32, %c0_i32_0 : i32, i32
  }
  func.func @transform_6(%arg0: i32) -> (i32, i32) {
    %c0_i32 = arith.constant 0 : i32
    %c0_i32_0 = arith.constant 0 : i32
    %c0_i32_1 = arith.constant 0 : i32
    return %c0_i32, %c0_i32_0 : i32, i32
  }
  func.func @transform_7(%arg0: i32) -> (i32, i32) {
    %c0_i32 = arith.constant 0 : i32
    %c0_i32_0 = arith.constant 0 : i32
    %c0_i32_1 = arith.constant 0 : i32
    return %c0_i32, %c0_i32_0 : i32, i32
  }
  func.func @transform_8(%arg0: i32) -> (i32, i32) {
    %c0_i32 = arith.constant 0 : i32
    %c0_i32_0 = arith.constant 0 : i32
    %c0_i32_1 = arith.constant 0 : i32
    return %c0_i32, %c0_i32_0 : i32, i32
  }
  func.func @transform_9(%arg0: i32) -> (i32, i32) {
    %c0_i32 = arith.constant 0 : i32
    %c0_i32_0 = arith.constant 0 : i32
    %c0_i32_1 = arith.constant 0 : i32
    return %c0_i32, %c0_i32_0 : i32, i32
  }
}

</mosaic_0001>

<llo_original>
// kernel: rnn_sequence.1
$region0: #{rnn_sequence.1}
  #allocation0 [shape = 'u32[]', space=smem, size = 0x4, offset = 0x4, fixed_abs, tag = 'smem constant byte address 0x4 - core index']
  #allocation1 [shape = 'u32[144,128]{1,0:T(1,128)}', space=vmem, size = 0x12000, scoped, tag = 'internal scratch']
  %s0 = inlined_call_operand.vmem [shape: f32[8,2,16], index: 0, kind: input, shape index: {}]
  %s1 = inlined_call_operand.hbm [shape: f32[2,32], index: 1, kind: input, shape index: {}]
  %s2 = inlined_call_operand.vmem [shape: f32[16,32], index: 2, kind: input, shape index: {}]
  %s3 = inlined_call_operand.vmem [shape: f32[32,32], index: 3, kind: input, shape index: {}]
  %s4 = inlined_call_operand.vmem [shape: f32[1,32], index: 4, kind: input, shape index: {}]
  %s5 = inlined_call_operand.vmem [shape: f32[16,8], index: 5, kind: input, shape index: {}]
  %s6 = inlined_call_operand.vmem [shape: f32[32,8], index: 6, kind: input, shape index: {}]
  %s7 = inlined_call_operand.vmem [shape: f32[1,8], index: 7, kind: input, shape index: {}]
  %s8 = inlined_call_operand.hbm [shape: f32[2,8], index: 8, kind: output, shape index: {0}]
  %s9 = inlined_call_operand.hbm [shape: f32[2,32], index: 9, kind: output, shape index: {1}]
  %10 = xla_tuple %s8, %s9
  %s11 = sld [smem:[#allocation0]]
  $region85: #{rnn_sequence.1} parent=0
    _
  %s13 = ssub.s32 1, %s11
  %s14 = scalar_select 0, %s13, %s11
  $region1: #{rnn_sequence.1} parent=0
    #allocation2 [shape = 'u8[1024]{0}', space=vmem, size = 0x400, scoped, tag = 'input window, operand 1, single buffered']
    #allocation3 [shape = 's32[2]{0}', space=sflag, size = 0x8, scoped, tag = 'scoped memory for rnn_sequence.1']
    #allocation4 [shape = 's32[2]{0}', space=sflag, size = 0x8, scoped, tag = 'scoped memory for rnn_sequence.1']
    #allocation5 [shape = 'u8[1024]{0}', space=vmem, size = 0x400, scoped, tag = 'output window, operand 0, single buffered']
    #allocation6 [shape = 'u8[1024]{0}', space=vmem, size = 0x400, scoped, tag = 'output window, operand 1, single buffered']
    #allocation7 [shape = 's32[1]{0}', space=sflag, size = 0x4, scoped, tag = 'scoped memory for rnn_sequence.1']
    %15 = vsyncpa [#allocation3], 0
    %16 = vsyncpa [#allocation4], 0
    %17 = vsyncpa [#allocation7], 0
    loop: start=0, step=1, limit=10
    $region2: #{rnn_sequence.1} parent=1 // loop_pre_header
      _
    $region3: #{rnn_sequence.1} parent=1 // loop_header
      %s19 = sphi 0, %s23
      %p20 = scmp.ge.s32.totalorder %s19, 10
      %s29 = sphi 0, %s31
      %s32 = sphi 0, %s29
      %s33 = sphi 0, %s32
      %s49 = sphi 0, %s33
      %s53 = sphi 0, %s53
      %s55 = sphi 0, %s53
      %s56 = sphi 0, %s55
      %s70 = sphi 0, %s56
      %s74 = sphi 0, %s74
      %s76 = sphi 0, %s74
      %s77 = sphi 0, %s76
      %s91 = sphi 0, %s77
      %s95 = sphi 0, %s95
      %s97 = sphi 0, %s95
      %s98 = sphi 0, %s97
      %s112 = sphi 0, %s98
      %s116 = sphi 0, %s116
      %s118 = sphi 0, %s116
      %s119 = sphi 0, %s118
      %s133 = sphi 0, %s119
      %s137 = sphi 0, %s137
      %s139 = sphi 0, %s137
      %s140 = sphi 0, %s139
      %s154 = sphi 0, %s140
      %s158 = sphi 0, %s158
      %s160 = sphi 0, %s158
      %s161 = sphi 0, %s160
      %s175 = sphi 0, %s161
      %s179 = sphi 0, %s179
      %s181 = sphi 0, %s179
      %s182 = sphi 0, %s181
      %s196 = sphi 0, %s182
      %s200 = sphi 0, %s200
      %s202 = sphi 0, %s200
      %s203 = sphi 0, %s202
      %s217 = sphi 0, %s203
      %s221 = sphi 0, %s221
      %s223 = sphi 0, %s221
      %s224 = sphi 0, %s223
      %s238 = sphi 0, %s224
    $region4: #{rnn_sequence.1} parent=1 // loop_header_branch
      %22 = sbr.rel (%p20) target = $region8
    $region5: #{rnn_sequence.1} parent=1 // loop_body
      %s24 = ssub.s32 %s19, 1
      %s25 = ssub.s32 %s19, 2
      %s26 = sadd.s32 %s19, 1
      %s27 = ssub.s32 %s19, %s26
      %p28 = scmp.eq.s32.totalorder %s27, 0
      %s30 = sadd.s32 %s29, 1
      %s31 = scalar_select %p28, %s29, %s30
      %p34 = pneg %p28
      %p35 = scmp.eq.s32.totalorder %s19, 7
      %p36 = por %p34, %p35
      %p37 = scmp.ne.s32.totalorder %s29, %s32
      %p38 = scmp.eq.s32.totalorder %s19, 0
      %p39 = por %p37, %p38
      %p40 = scmp.ne.s32.totalorder %s29, %s32
      %p41 = scmp.eq.s32.totalorder %s24, 7
      %p42 = por %p40, %p41
      %p43 = scmp.ne.s32.totalorder %s32, %s33
      %p44 = scmp.eq.s32.totalorder %s24, 0
      %p45 = por %p43, %p44
      %p46 = scmp.ne.s32.totalorder %s32, %s33
      %p47 = scmp.eq.s32.totalorder %s25, 7
      %p48 = por %p46, %p47
      %p50 = scmp.ne.s32.totalorder %s33, %s49
      %p51 = scmp.eq.s32.totalorder %s25, 0
      %p52 = por %p50, %p51
      %s54 = sadd.s32 %s53, 1
      %p57 = scmp.eq.s32.totalorder %s19, 7
      %p58 = scmp.ne.s32.totalorder %s53, %s55
      %p59 = scmp.eq.s32.totalorder %s19, 0
      %p60 = por %p58, %p59
      %p61 = scmp.ne.s32.totalorder %s53, %s55
      %p62 = scmp.eq.s32.totalorder %s24, 7
      %p63 = por %p61, %p62
      %p64 = scmp.ne.s32.totalorder %s55, %s56
      %p65 = scmp.eq.s32.totalorder %s24, 0
      %p66 = por %p64, %p65
      %p67 = scmp.ne.s32.totalorder %s55, %s56
      %p68 = scmp.eq.s32.totalorder %s25, 7
      %p69 = por %p67, %p68
      %p71 = scmp.ne.s32.totalorder %s56, %s70
      %p72 = scmp.eq.s32.totalorder %s25, 0
      %p73 = por %p71, %p72
      %s75 = sadd.s32 %s74, 1
      %p78 = scmp.eq.s32.totalorder %s19, 7
      %p79 = scmp.ne.s32.totalorder %s74, %s76
      %p80 = scmp.eq.s32.totalorder %s19, 0
      %p81 = por %p79, %p80
      %p82 = scmp.ne.s32.totalorder %s74, %s76
      %p83 = scmp.eq.s32.totalorder %s24, 7
      %p84 = por %p82, %p83
      %p85 = scmp.ne.s32.totalorder %s76, %s77
      %p86 = scmp.eq.s32.totalorder %s24, 0
      %p87 = por %p85, %p86
      %p88 = scmp.ne.s32.totalorder %s76, %s77
      %p89 = scmp.eq.s32.totalorder %s25, 7
      %p90 = por %p88, %p89
      %p92 = scmp.ne.s32.totalorder %s77, %s91
      %p93 = scmp.eq.s32.totalorder %s25, 0
      %p94 = por %p92, %p93
      %s96 = sadd.s32 %s95, 1
      %p99 = scmp.eq.s32.totalorder %s19, 7
      %p100 = scmp.ne.s32.totalorder %s95, %s97
      %p101 = scmp.eq.s32.totalorder %s19, 0
      %p102 = por %p100, %p101
      %p103 = scmp.ne.s32.totalorder %s95, %s97
      %p104 = scmp.eq.s32.totalorder %s24, 7
      %p105 = por %p103, %p104
      %p106 = scmp.ne.s32.totalorder %s97, %s98
      %p107 = scmp.eq.s32.totalorder %s24, 0
      %p108 = por %p106, %p107
      %p109 = scmp.ne.s32.totalorder %s97, %s98
      %p110 = scmp.eq.s32.totalorder %s25, 7
      %p111 = por %p109, %p110
      %p113 = scmp.ne.s32.totalorder %s98, %s112
      %p114 = scmp.eq.s32.totalorder %s25, 0
      %p115 = por %p113, %p114
      %s117 = sadd.s32 %s116, 1
      %p120 = scmp.eq.s32.totalorder %s19, 7
      %p121 = scmp.ne.s32.totalorder %s116, %s118
      %p122 = scmp.eq.s32.totalorder %s19, 0
      %p123 = por %p121, %p122
      %p124 = scmp.ne.s32.totalorder %s116, %s118
      %p125 = scmp.eq.s32.totalorder %s24, 7
      %p126 = por %p124, %p125
      %p127 = scmp.ne.s32.totalorder %s118, %s119
      %p128 = scmp.eq.s32.totalorder %s24, 0
      %p129 = por %p127, %p128
      %p130 = scmp.ne.s32.totalorder %s118, %s119
      %p131 = scmp.eq.s32.totalorder %s25, 7
      %p132 = por %p130, %p131
      %p134 = scmp.ne.s32.totalorder %s119, %s133
      %p135 = scmp.eq.s32.totalorder %s25, 0
      %p136 = por %p134, %p135
      %s138 = sadd.s32 %s137, 1
      %p141 = scmp.eq.s32.totalorder %s19, 7
      %p142 = scmp.ne.s32.totalorder %s137, %s139
      %p143 = scmp.eq.s32.totalorder %s19, 0
      %p144 = por %p142, %p143
      %p145 = scmp.ne.s32.totalorder %s137, %s139
      %p146 = scmp.eq.s32.totalorder %s24, 7
      %p147 = por %p145, %p146
      %p148 = scmp.ne.s32.totalorder %s139, %s140
      %p149 = scmp.eq.s32.totalorder %s24, 0
      %p150 = por %p148, %p149
      %p151 = scmp.ne.s32.totalorder %s139, %s140
      %p152 = scmp.eq.s32.totalorder %s25, 7
      %p153 = por %p151, %p152
      %p155 = scmp.ne.s32.totalorder %s140, %s154
      %p156 = scmp.eq.s32.totalorder %s25, 0
      %p157 = por %p155, %p156
      %s159 = sadd.s32 %s158, 1
      %p162 = scmp.eq.s32.totalorder %s19, 7
      %p163 = scmp.ne.s32.totalorder %s158, %s160
      %p164 = scmp.eq.s32.totalorder %s19, 0
      %p165 = por %p163, %p164
      %p166 = scmp.ne.s32.totalorder %s158, %s160
      %p167 = scmp.eq.s32.totalorder %s24, 7
      %p168 = por %p166, %p167
      %p169 = scmp.ne.s32.totalorder %s160, %s161
      %p170 = scmp.eq.s32.totalorder %s24, 0
      %p171 = por %p169, %p170
      %p172 = scmp.ne.s32.totalorder %s160, %s161
      %p173 = scmp.eq.s32.totalorder %s25, 7
      %p174 = por %p172, %p173
      %p176 = scmp.ne.s32.totalorder %s161, %s175
      %p177 = scmp.eq.s32.totalorder %s25, 0
      %p178 = por %p176, %p177
      %s180 = sadd.s32 %s179, 1
      %p183 = scmp.eq.s32.totalorder %s19, 7
      %p184 = scmp.ne.s32.totalorder %s179, %s181
      %p185 = scmp.eq.s32.totalorder %s19, 0
      %p186 = por %p184, %p185
      %p187 = scmp.ne.s32.totalorder %s179, %s181
      %p188 = scmp.eq.s32.totalorder %s24, 7
      %p189 = por %p187, %p188
      %p190 = scmp.ne.s32.totalorder %s181, %s182
      %p191 = scmp.eq.s32.totalorder %s24, 0
      %p192 = por %p190, %p191
      %p193 = scmp.ne.s32.totalorder %s181, %s182
      %p194 = scmp.eq.s32.totalorder %s25, 7
      %p195 = por %p193, %p194
      %p197 = scmp.ne.s32.totalorder %s182, %s196
      %p198 = scmp.eq.s32.totalorder %s25, 0
      %p199 = por %p197, %p198
      %s201 = sadd.s32 %s200, 1
      %p204 = scmp.eq.s32.totalorder %s19, 7
      %p205 = scmp.ne.s32.totalorder %s200, %s202
      %p206 = scmp.eq.s32.totalorder %s19, 0
      %p207 = por %p205, %p206
      %p208 = scmp.ne.s32.totalorder %s200, %s202
      %p209 = scmp.eq.s32.totalorder %s24, 7
      %p210 = por %p208, %p209
      %p211 = scmp.ne.s32.totalorder %s202, %s203
      %p212 = scmp.eq.s32.totalorder %s24, 0
      %p213 = por %p211, %p212
      %p214 = scmp.ne.s32.totalorder %s202, %s203
      %p215 = scmp.eq.s32.totalorder %s25, 7
      %p216 = por %p214, %p215
      %p218 = scmp.ne.s32.totalorder %s203, %s217
      %p219 = scmp.eq.s32.totalorder %s25, 0
      %p220 = por %p218, %p219
      %s222 = sadd.s32 %s221, 1
      %p225 = scmp.eq.s32.totalorder %s19, 7
      %p226 = scmp.ne.s32.totalorder %s221, %s223
      %p227 = scmp.eq.s32.totalorder %s19, 0
      %p228 = por %p226, %p227
      %p229 = scmp.ne.s32.totalorder %s221, %s223
      %p230 = scmp.eq.s32.totalorder %s24, 7
      %p231 = por %p229, %p230
      %p232 = scmp.ne.s32.totalorder %s223, %s224
      %p233 = scmp.eq.s32.totalorder %s24, 0
      %p234 = por %p232, %p233
      %p235 = scmp.ne.s32.totalorder %s223, %s224
      %p236 = scmp.eq.s32.totalorder %s25, 7
      %p237 = por %p235, %p236
      %p239 = scmp.ne.s32.totalorder %s224, %s238
      %p240 = scmp.eq.s32.totalorder %s25, 0
      %p241 = por %p239, %p240
      %p242 = scmp.le.s32.totalorder 1, %s19
      %p243 = scmp.lt.s32.totalorder %s19, 9
      %p244 = pnand %p242, %p243
      %p245 = pneg %p244
      // Predicated region
      $region9: #{rnn_sequence.1} parent=5 // pred_check
        _
      $region10: #{rnn_sequence.1} parent=5 // pred_check_branch
        %247 = sbr.rel (%p244) target = $region12
      $region11: #{rnn_sequence.1} parent=5 // pred_region
        %s248 = ssub.s32 %s19, 1
        // Predicated region
        $region13: #{rnn_sequence.1} parent=11 // pred_check
          %p249 = pneg %p66
        $region14: #{rnn_sequence.1} parent=11 // pred_check_branch
          %251 = sbr.rel (%p249) target = $region16
        $region15: #{rnn_sequence.1} parent=11 // pred_region
          %s253 = ssub.s32 32, 32
          %254 = vsyncadd [#allocation3], %s253
          %s256 = sshll.u32 [#allocation2], 4
          %s257 = int_to_ptr.vmem [resolvable:$true] %s256
          %259 = dma.hbm_to_vmem [thread:$0]  %s1, 32, %s257, [#allocation3]
        $region16: #{rnn_sequence.1} parent=11 // pred_fallthru
          _
        // Predicated region
        $region17: #{rnn_sequence.1} parent=11 // pred_check
          %p260 = pneg %p87
        $region18: #{rnn_sequence.1} parent=11 // pred_check_branch
          %262 = sbr.rel (%p260) target = $region20
        $region19: #{rnn_sequence.1} parent=11 // pred_region
          _
        $region20: #{rnn_sequence.1} parent=11 // pred_fallthru
          _
        // Predicated region
        $region21: #{rnn_sequence.1} parent=11 // pred_check
          %p263 = pneg %p108
        $region22: #{rnn_sequence.1} parent=11 // pred_check_branch
          %265 = sbr.rel (%p263) target = $region24
        $region23: #{rnn_sequence.1} parent=11 // pred_region
          _
        $region24: #{rnn_sequence.1} parent=11 // pred_fallthru
          _
        // Predicated region
        $region25: #{rnn_sequence.1} parent=11 // pred_check
          %p266 = pneg %p129
        $region26: #{rnn_sequence.1} parent=11 // pred_check_branch
          %268 = sbr.rel (%p266) target = $region28
        $region27: #{rnn_sequence.1} parent=11 // pred_region
          _
        $region28: #{rnn_sequence.1} parent=11 // pred_fallthru
          _
        // Predicated region
        $region29: #{rnn_sequence.1} parent=11 // pred_check
          %p269 = pneg %p150
        $region30: #{rnn_sequence.1} parent=11 // pred_check_branch
          %271 = sbr.rel (%p269) target = $region32
        $region31: #{rnn_sequence.1} parent=11 // pred_region
          _
        $region32: #{rnn_sequence.1} parent=11 // pred_fallthru
          _
        // Predicated region
        $region33: #{rnn_sequence.1} parent=11 // pred_check
          %p272 = pneg %p171
        $region34: #{rnn_sequence.1} parent=11 // pred_check_branch
          %274 = sbr.rel (%p272) target = $region36
        $region35: #{rnn_sequence.1} parent=11 // pred_region
          _
        $region36: #{rnn_sequence.1} parent=11 // pred_fallthru
          _
        // Predicated region
        $region37: #{rnn_sequence.1} parent=11 // pred_check
          %p275 = pneg %p192
        $region38: #{rnn_sequence.1} parent=11 // pred_check_branch
          %277 = sbr.rel (%p275) target = $region40
        $region39: #{rnn_sequence.1} parent=11 // pred_region
          _
        $region40: #{rnn_sequence.1} parent=11 // pred_fallthru
          _
      $region12: #{rnn_sequence.1} parent=5 // pred_fallthru
        _
      %p278 = scmp.lt.s32.totalorder %s19, 8
      // Predicated region
      $region41: #{rnn_sequence.1} parent=5 // pred_check
        %p279 = pneg %p278
      $region42: #{rnn_sequence.1} parent=5 // pred_check_branch
        %281 = sbr.rel (%p279) target = $region44
      $region43: #{rnn_sequence.1} parent=5 // pred_region
        // Predicated region
        $region45: #{rnn_sequence.1} parent=43 // pred_check
          %p282 = pneg %p39
        $region46: #{rnn_sequence.1} parent=43 // pred_check_branch
          %284 = sbr.rel (%p282) target = $region48
        $region47: #{rnn_sequence.1} parent=43 // pred_region
          %p285 = scmp.lt.s32.totalorder %s19, 7
          %s286 = scalar_select %p285, %s19, 7
          %s287 = smul.addr %s286, 2
          %s288 = scalar_lea.vmem %s0, %s287
        $region48: #{rnn_sequence.1} parent=43 // pred_fallthru
          _
      $region44: #{rnn_sequence.1} parent=5 // pred_fallthru
        _
      %p289 = scmp.le.s32.totalorder 1, %s19
      %p290 = scmp.lt.s32.totalorder %s19, 9
      %p291 = pnand %p289, %p290
      %p292 = pneg %p291
      // Predicated region
      $region49: #{rnn_sequence.1} parent=5 // pred_check
        _
      $region50: #{rnn_sequence.1} parent=5 // pred_check_branch
        %294 = sbr.rel (%p291) target = $region52
      $region51: #{rnn_sequence.1} parent=5 // pred_region
        %s295 = ssub.s32 %s19, 1
        // Predicated region
        $region53: #{rnn_sequence.1} parent=51 // pred_check
          %p296 = pneg %p66
        $region54: #{rnn_sequence.1} parent=51 // pred_check_branch
          %298 = sbr.rel (%p296) target = $region56
        $region55: #{rnn_sequence.1} parent=51 // pred_region
          %299 = dma.done [#allocation3], 32
        $region56: #{rnn_sequence.1} parent=51 // pred_fallthru
          _
        %p300 = scmp.lt.s32.totalorder %s24, 7
        %s301 = scalar_select %p300, %s24, 7
        %s302 = smul.addr %s301, 2
        %s303 = scalar_lea.vmem %s0, %s302
        %p304 = pneg %p45
        %p305 = pneg %p42
        %p306 = pneg %p66
        %p307 = pneg %p63
        %p308 = pneg %p87
        %p309 = pneg %p84
        %p310 = pneg %p108
        %p311 = pneg %p105
        %p312 = pneg %p129
        %p313 = pneg %p126
        %p314 = pneg %p150
        %p315 = pneg %p147
        %p316 = pneg %p171
        %p317 = pneg %p168
        %p318 = pneg %p192
        %p319 = pneg %p189
        %p320 = pneg %p213
        %p321 = pneg %p210
        %p322 = pneg %p234
        %p323 = pneg %p231
        %p324 = scmp.lt.s32.totalorder %s24, 7
        %s325 = scalar_select %p324, %s24, 7
        %s326 = smul.addr %s325, 2
        %s327 = scalar_lea.vmem %s0, %s326
        %p328 = scmp.eq.s32.totalorder %s24, 0
        // Predicated region
        $region57: #{rnn_sequence.1} parent=51 // pred_check
          %p329 = pneg %p328
        $region58: #{rnn_sequence.1} parent=51 // pred_check_branch
          %331 = sbr.rel (%p329) target = $region60
        $region59: #{rnn_sequence.1} parent=51 // pred_region
          %v332 = vld [vmem:[#allocation2] sm:$0x3]
          %vm333 = vcmask 254976
          %334 = vst.msk [vmem:[#allocation6] sm:$0x3] %vm333, %v332
        $region60: #{rnn_sequence.1} parent=51 // pred_fallthru
          _
        %v335 = vld [vmem:[%s327] sm:$0x3]
        %v336 = vld [vmem:[#allocation6] sm:$0x3]
        %v337 = vld [vmem:[%s2] sm:$0xff]
        %v338 = vld [vmem:[%s2 + $0x8] sm:$0xff]
        %v339 = vld [vmem:[%s3] sm:$0xff]
        %v340 = vld [vmem:[%s3 + $0x8] sm:$0xff]
        %v341 = vld [vmem:[%s3 + $0x10] sm:$0xff]
        %v342 = vld [vmem:[%s3 + $0x18] sm:$0xff]
        %vm343 = vcmask 261120
        %v345 = vsel %vm343, %v336, 0
        %347 = vmatprep.subr.mxu0 0.0
        %348 = vmatpush1.msra.mxu0 0.0
        %349 = vmatprep.subr.mxu0 0.0
        %350 = vmatpush1.msra.mxu0 0.0
        %351 = vmatprep.subr.mxu0 0.0
        %352 = vmatpush1.msra.mxu0 0.0
        %353 = vmatprep.subr.mxu0 0.0
        %354 = vmatpush1.msra.mxu0 0.0
        %355 = vmatprep.subr.mxu0 0.0
        %356 = vmatpush1.msra.mxu0 0.0
        %357 = vmatprep.subr.mxu0 0.0
        %358 = vmatpush1.msra.mxu0 0.0
        %359 = vmatprep.subr.mxu0 0.0
        %360 = vmatpush1.msra.mxu0 0.0
        %361 = vmatprep.subr.mxu0 0.0
        %362 = vmatpush1.msra.mxu0 0.0
        %363 = vmatprep.subr.mxu0 0.0
        %364 = vmatpush1.msra.mxu0 0.0
        %365 = vmatprep.subr.mxu0 0.0
        %366 = vmatpush1.msra.mxu0 0.0
        %367 = vmatprep.subr.mxu0 0.0
        %368 = vmatpush1.msra.mxu0 0.0
        %369 = vmatprep.subr.mxu0 0.0
        %370 = vmatpush1.msra.mxu0 0.0
        %371 = vmatprep.subr.mxu0 0.0
        %372 = vmatpush1.msra.mxu0 %v342
        %373 = vmatprep.subr.mxu0 0.0
        %374 = vmatpush1.msra.mxu0 %v341
        %375 = vmatprep.subr.mxu0 0.0
        %376 = vmatpush1.msra.mxu0 %v340
        %377 = vmatprep.subr.mxu0 0.0
        %378 = vmatpush1.msra.mxu0 %v339
        %379 = vmatprep.subr.mxu0 0.0
        %380 = vmatpush2.msra.mxu0 0.0
        %381 = vmatprep.subr.mxu0 0.0
        %382 = vmatpush2.msra.mxu0 0.0
        %383 = vmatprep.subr.mxu0 0.0
        %384 = vmatpush2.msra.mxu0 0.0
        %385 = vmatprep.subr.mxu0 0.0
        %386 = vmatpush2.msra.mxu0 0.0
        %387 = vmatprep.subr.mxu0 0.0
        %388 = vmatpush2.msra.mxu0 0.0
        %389 = vmatprep.subr.mxu0 0.0
        %390 = vmatpush2.msra.mxu0 0.0
        %391 = vmatprep.subr.mxu0 0.0
        %392 = vmatpush2.msra.mxu0 0.0
        %393 = vmatprep.subr.mxu0 0.0
        %394 = vmatpush2.msra.mxu0 0.0
        %395 = vmatprep.subr.mxu0 0.0
        %396 = vmatpush2.msra.mxu0 0.0
        %397 = vmatprep.subr.mxu0 0.0
        %398 = vmatpush2.msra.mxu0 0.0
        %399 = vmatprep.subr.mxu0 0.0
        %400 = vmatpush2.msra.mxu0 0.0
        %401 = vmatprep.subr.mxu0 0.0
        %402 = vmatpush2.msra.mxu0 0.0
        %403 = vmatprep.subr.mxu0 0.0
        %404 = vmatpush2.msra.mxu0 0.0
        %405 = vmatprep.subr.mxu0 0.0
        %406 = vmatpush2.msra.mxu0 0.0
        %407 = vmatprep.subr.mxu0 0.0
        %408 = vmatpush2.msra.mxu0 0.0
        %409 = vmatprep.subr.mxu0 0.0
        %410 = vmatpush2.msra.mxu0 0.0
        %411 = vmatprep.mubr.f32.mxu0 0.0
        %412 = vmatmul.mubr.f32.gmra.mxu0 %v345
        %v413 = vpop.f32.mrf.mxu0
        %v414 = vadd.f32 0.0, %v413
        %v415 = vpop.f32.mrf.mxu0
        %416 = vdwg.mxu0
        %vm417 = vcmask 130048
        %v419 = vsel %vm417, %v335, 0
        %421 = vmatprep.subr.mxu0 0.0
        %422 = vmatpush1.msra.mxu0 0.0
        %423 = vmatprep.subr.mxu0 0.0
        %424 = vmatpush1.msra.mxu0 0.0
        %425 = vmatprep.subr.mxu0 0.0
        %426 = vmatpush1.msra.mxu0 0.0
        %427 = vmatprep.subr.mxu0 0.0
        %428 = vmatpush1.msra.mxu0 0.0
        %429 = vmatprep.subr.mxu0 0.0
        %430 = vmatpush1.msra.mxu0 0.0
        %431 = vmatprep.subr.mxu0 0.0
        %432 = vmatpush1.msra.mxu0 0.0
        %433 = vmatprep.subr.mxu0 0.0
        %434 = vmatpush1.msra.mxu0 0.0
        %435 = vmatprep.subr.mxu0 0.0
        %436 = vmatpush1.msra.mxu0 0.0
        %437 = vmatprep.subr.mxu0 0.0
        %438 = vmatpush1.msra.mxu0 0.0
        %439 = vmatprep.subr.mxu0 0.0
        %440 = vmatpush1.msra.mxu0 0.0
        %441 = vmatprep.subr.mxu0 0.0
        %442 = vmatpush1.msra.mxu0 0.0
        %443 = vmatprep.subr.mxu0 0.0
        %444 = vmatpush1.msra.mxu0 0.0
        %445 = vmatprep.subr.mxu0 0.0
        %446 = vmatpush1.msra.mxu0 0.0
        %447 = vmatprep.subr.mxu0 0.0
        %448 = vmatpush1.msra.mxu0 0.0
        %449 = vmatprep.subr.mxu0 0.0
        %450 = vmatpush1.msra.mxu0 %v338
        %451 = vmatprep.subr.mxu0 0.0
        %452 = vmatpush1.msra.mxu0 %v337
        %453 = vmatprep.subr.mxu0 0.0
        %454 = vmatpush2.msra.mxu0 0.0
        %455 = vmatprep.subr.mxu0 0.0
        %456 = vmatpush2.msra.mxu0 0.0
        %457 = vmatprep.subr.mxu0 0.0
        %458 = vmatpush2.msra.mxu0 0.0
        %459 = vmatprep.subr.mxu0 0.0
        %460 = vmatpush2.msra.mxu0 0.0
        %461 = vmatprep.subr.mxu0 0.0
        %462 = vmatpush2.msra.mxu0 0.0
        %463 = vmatprep.subr.mxu0 0.0
        %464 = vmatpush2.msra.mxu0 0.0
        %465 = vmatprep.subr.mxu0 0.0
        %466 = vmatpush2.msra.mxu0 0.0
        %467 = vmatprep.subr.mxu0 0.0
        %468 = vmatpush2.msra.mxu0 0.0
        %469 = vmatprep.subr.mxu0 0.0
        %470 = vmatpush2.msra.mxu0 0.0
        %471 = vmatprep.subr.mxu0 0.0
        %472 = vmatpush2.msra.mxu0 0.0
        %473 = vmatprep.subr.mxu0 0.0
        %474 = vmatpush2.msra.mxu0 0.0
        %475 = vmatprep.subr.mxu0 0.0
        %476 = vmatpush2.msra.mxu0 0.0
        %477 = vmatprep.subr.mxu0 0.0
        %478 = vmatpush2.msra.mxu0 0.0
        %479 = vmatprep.subr.mxu0 0.0
        %480 = vmatpush2.msra.mxu0 0.0
        %481 = vmatprep.subr.mxu0 0.0
        %482 = vmatpush2.msra.mxu0 0.0
        %483 = vmatprep.subr.mxu0 0.0
        %484 = vmatpush2.msra.mxu0 0.0
        %485 = vmatprep.mubr.f32.mxu0 0.0
        %486 = vmatmul.mubr.f32.gmra.mxu0 %v419
        %v487 = vpop.f32.mrf.mxu0
        %v488 = vadd.f32 %v414, %v487
        %v489 = vpop.f32.mrf.mxu0
        %490 = vdwg.mxu0
        %v491 = vld [vmem:[%s4] sm:$0x1]
        %v493 = vlaneseq
        %v494 = vshrl.u32 %v493, 7
        %v495 = vsub.s32 0, %v494
        %v496 = vrot.slane %v491, %v495
        %v498 = vadd.f32 %v488, %v496
        %v499 = vtanh.pop %v498
        %vm500 = vcmask 254976
        %501 = vst.msk [vmem:[#allocation6] sm:$0x3] %vm500, %v499
        %p502 = scmp.eq.s32.totalorder %s24, 7
        // Predicated region
        $region61: #{rnn_sequence.1} parent=51 // pred_check
          %p503 = pneg %p502
        $region62: #{rnn_sequence.1} parent=51 // pred_check_branch
          %505 = sbr.rel (%p503) target = $region64
        $region63: #{rnn_sequence.1} parent=51 // pred_region
          %v506 = vld [vmem:[%s5] sm:$0xff]
          %v507 = vld [vmem:[%s5 + $0x8] sm:$0xff]
          %v508 = vld [vmem:[%s6] sm:$0xff]
          %v509 = vld [vmem:[%s6 + $0x8] sm:$0xff]
          %v510 = vld [vmem:[%s6 + $0x10] sm:$0xff]
          %v511 = vld [vmem:[%s6 + $0x18] sm:$0xff]
          %512 = vmatprep.subr.mxu0 0.0
          %513 = vmatpush1.msra.mxu0 0.0
          %514 = vmatprep.subr.mxu0 0.0
          %515 = vmatpush1.msra.mxu0 0.0
          %516 = vmatprep.subr.mxu0 0.0
          %517 = vmatpush1.msra.mxu0 0.0
          %518 = vmatprep.subr.mxu0 0.0
          %519 = vmatpush1.msra.mxu0 0.0
          %520 = vmatprep.subr.mxu0 0.0
          %521 = vmatpush1.msra.mxu0 0.0
          %522 = vmatprep.subr.mxu0 0.0
          %523 = vmatpush1.msra.mxu0 0.0
          %524 = vmatprep.subr.mxu0 0.0
          %525 = vmatpush1.msra.mxu0 0.0
          %526 = vmatprep.subr.mxu0 0.0
          %527 = vmatpush1.msra.mxu0 0.0
          %528 = vmatprep.subr.mxu0 0.0
          %529 = vmatpush1.msra.mxu0 0.0
          %530 = vmatprep.subr.mxu0 0.0
          %531 = vmatpush1.msra.mxu0 0.0
          %532 = vmatprep.subr.mxu0 0.0
          %533 = vmatpush1.msra.mxu0 0.0
          %534 = vmatprep.subr.mxu0 0.0
          %535 = vmatpush1.msra.mxu0 0.0
          %536 = vmatprep.subr.mxu0 0.0
          %537 = vmatpush1.msra.mxu0 %v511
          %538 = vmatprep.subr.mxu0 0.0
          %539 = vmatpush1.msra.mxu0 %v510
          %540 = vmatprep.subr.mxu0 0.0
          %541 = vmatpush1.msra.mxu0 %v509
          %542 = vmatprep.subr.mxu0 0.0
          %543 = vmatpush1.msra.mxu0 %v508
          %544 = vmatprep.subr.mxu0 0.0
          %545 = vmatpush2.msra.mxu0 0.0
          %546 = vmatprep.subr.mxu0 0.0
          %547 = vmatpush2.msra.mxu0 0.0
          %548 = vmatprep.subr.mxu0 0.0
          %549 = vmatpush2.msra.mxu0 0.0
          %550 = vmatprep.subr.mxu0 0.0
          %551 = vmatpush2.msra.mxu0 0.0
          %552 = vmatprep.subr.mxu0 0.0
          %553 = vmatpush2.msra.mxu0 0.0
          %554 = vmatprep.subr.mxu0 0.0
          %555 = vmatpush2.msra.mxu0 0.0
          %556 = vmatprep.subr.mxu0 0.0
          %557 = vmatpush2.msra.mxu0 0.0
          %558 = vmatprep.subr.mxu0 0.0
          %559 = vmatpush2.msra.mxu0 0.0
          %560 = vmatprep.subr.mxu0 0.0
          %561 = vmatpush2.msra.mxu0 0.0
          %562 = vmatprep.subr.mxu0 0.0
          %563 = vmatpush2.msra.mxu0 0.0
          %564 = vmatprep.subr.mxu0 0.0
          %565 = vmatpush2.msra.mxu0 0.0
          %566 = vmatprep.subr.mxu0 0.0
          %567 = vmatpush2.msra.mxu0 0.0
          %568 = vmatprep.subr.mxu0 0.0
          %569 = vmatpush2.msra.mxu0 0.0
          %570 = vmatprep.subr.mxu0 0.0
          %571 = vmatpush2.msra.mxu0 0.0
          %572 = vmatprep.subr.mxu0 0.0
          %573 = vmatpush2.msra.mxu0 0.0
          %574 = vmatprep.subr.mxu0 0.0
          %575 = vmatpush2.msra.mxu0 0.0
          %576 = vmatprep.mubr.f32.mxu0 0.0
          %577 = vmatmul.mubr.f32.gmra.mxu0 %v345
          %v578 = vpop.f32.mrf.mxu0
          %v579 = vadd.f32 0.0, %v578
          %v580 = vpop.f32.mrf.mxu0
          %581 = vdwg.mxu0
          %582 = vmatprep.subr.mxu0 0.0
          %583 = vmatpush1.msra.mxu0 0.0
          %584 = vmatprep.subr.mxu0 0.0
          %585 = vmatpush1.msra.mxu0 0.0
          %586 = vmatprep.subr.mxu0 0.0
          %587 = vmatpush1.msra.mxu0 0.0
          %588 = vmatprep.subr.mxu0 0.0
          %589 = vmatpush1.msra.mxu0 0.0
          %590 = vmatprep.subr.mxu0 0.0
          %591 = vmatpush1.msra.mxu0 0.0
          %592 = vmatprep.subr.mxu0 0.0
          %593 = vmatpush1.msra.mxu0 0.0
          %594 = vmatprep.subr.mxu0 0.0
          %595 = vmatpush1.msra.mxu0 0.0
          %596 = vmatprep.subr.mxu0 0.0
          %597 = vmatpush1.msra.mxu0 0.0
          %598 = vmatprep.subr.mxu0 0.0
          %599 = vmatpush1.msra.mxu0 0.0
          %600 = vmatprep.subr.mxu0 0.0
          %601 = vmatpush1.msra.mxu0 0.0
          %602 = vmatprep.subr.mxu0 0.0
          %603 = vmatpush1.msra.mxu0 0.0
          %604 = vmatprep.subr.mxu0 0.0
          %605 = vmatpush1.msra.mxu0 0.0
          %606 = vmatprep.subr.mxu0 0.0
          %607 = vmatpush1.msra.mxu0 0.0
          %608 = vmatprep.subr.mxu0 0.0
          %609 = vmatpush1.msra.mxu0 0.0
          %610 = vmatprep.subr.mxu0 0.0
          %611 = vmatpush1.msra.mxu0 %v507
          %612 = vmatprep.subr.mxu0 0.0
          %613 = vmatpush1.msra.mxu0 %v506
          %614 = vmatprep.subr.mxu0 0.0
          %615 = vmatpush2.msra.mxu0 0.0
          %616 = vmatprep.subr.mxu0 0.0
          %617 = vmatpush2.msra.mxu0 0.0
          %618 = vmatprep.subr.mxu0 0.0
          %619 = vmatpush2.msra.mxu0 0.0
          %620 = vmatprep.subr.mxu0 0.0
          %621 = vmatpush2.msra.mxu0 0.0
          %622 = vmatprep.subr.mxu0 0.0
          %623 = vmatpush2.msra.mxu0 0.0
          %624 = vmatprep.subr.mxu0 0.0
          %625 = vmatpush2.msra.mxu0 0.0
          %626 = vmatprep.subr.mxu0 0.0
          %627 = vmatpush2.msra.mxu0 0.0
          %628 = vmatprep.subr.mxu0 0.0
          %629 = vmatpush2.msra.mxu0 0.0
          %630 = vmatprep.subr.mxu0 0.0
          %631 = vmatpush2.msra.mxu0 0.0
          %632 = vmatprep.subr.mxu0 0.0
          %633 = vmatpush2.msra.mxu0 0.0
          %634 = vmatprep.subr.mxu0 0.0
          %635 = vmatpush2.msra.mxu0 0.0
          %636 = vmatprep.subr.mxu0 0.0
          %637 = vmatpush2.msra.mxu0 0.0
          %638 = vmatprep.subr.mxu0 0.0
          %639 = vmatpush2.msra.mxu0 0.0
          %640 = vmatprep.subr.mxu0 0.0
          %641 = vmatpush2.msra.mxu0 0.0
          %642 = vmatprep.subr.mxu0 0.0
          %643 = vmatpush2.msra.mxu0 0.0
          %644 = vmatprep.subr.mxu0 0.0
          %645 = vmatpush2.msra.mxu0 0.0
          %646 = vmatprep.mubr.f32.mxu0 0.0
          %647 = vmatmul.mubr.f32.gmra.mxu0 %v419
          %v648 = vpop.f32.mrf.mxu0
          %v649 = vadd.f32 %v579, %v648
          %v650 = vpop.f32.mrf.mxu0
          %651 = vdwg.mxu0
          %v652 = vld [vmem:[%s7] sm:$0x1]
          %v654 = vlaneseq
          %v655 = vshrl.u32 %v654, 7
          %v656 = vsub.s32 0, %v655
          %v657 = vrot.slane %v652, %v656
          %v659 = vadd.f32 %v649, %v657
          %vm660 = vcmask 58368
          %v661 = vsel %vm660, %v659, -inf
          %662 = vmax.xlane.f32.xlu0 %v661
          %v663 = vpop.xlane.xlu0 %662
          %v664 = vsub.f32 %v659, %v663
          %v665 = vmul.f32 %v664, 1.442695
          %v666 = vpow.pop %v665
          %v667 = vsel %vm660, %v666, 0.0
          %668 = vadd.xlane.f32.xlu0 %v667
          %v669 = vpop.xlane.xlu0 %668
          %v670 = vlog2.pop %v669
          %v671 = vmul.f32 %v670, 0.6931472
          %v672 = vsub.f32 %v664, %v671
          %673 = vst.msk [vmem:[#allocation5] sm:$0x3] %vm660, %v672
        $region64: #{rnn_sequence.1} parent=51 // pred_fallthru
          _
        // Predicated region
        $region65: #{rnn_sequence.1} parent=51 // pred_check
          %p674 = pneg %p210
        $region66: #{rnn_sequence.1} parent=51 // pred_check_branch
          %676 = sbr.rel (%p674) target = $region68
        $region67: #{rnn_sequence.1} parent=51 // pred_region
          %s678 = ssub.s32 32, 32
          %679 = vsyncadd [#allocation4], %s678
          %s681 = sshll.u32 [#allocation5], 4
          %s682 = int_to_ptr.vmem [resolvable:$true] %s681
          %684 = dma.vmem_to_hbm [thread:$0]  %s682, 32, %s8, [#allocation4]
        $region68: #{rnn_sequence.1} parent=51 // pred_fallthru
          _
        // Predicated region
        $region69: #{rnn_sequence.1} parent=51 // pred_check
          %p685 = pneg %p231
        $region70: #{rnn_sequence.1} parent=51 // pred_check_branch
          %687 = sbr.rel (%p685) target = $region72
        $region71: #{rnn_sequence.1} parent=51 // pred_region
          %s689 = ssub.s32 32, 32
          %690 = vsyncadd [#allocation7], %s689
          %s692 = sshll.u32 [#allocation6], 4
          %s693 = int_to_ptr.vmem [resolvable:$true] %s692
          %695 = dma.vmem_to_hbm [thread:$0]  %s693, 32, %s9, [#allocation7]
        $region72: #{rnn_sequence.1} parent=51 // pred_fallthru
          _
        // Predicated region
        $region73: #{rnn_sequence.1} parent=51 // pred_check
          %p696 = pneg %p210
        $region74: #{rnn_sequence.1} parent=51 // pred_check_branch
          %698 = sbr.rel (%p696) target = $region76
        $region75: #{rnn_sequence.1} parent=51 // pred_region
          %699 = dma.done [#allocation4], 32
        $region76: #{rnn_sequence.1} parent=51 // pred_fallthru
          _
        // Predicated region
        $region77: #{rnn_sequence.1} parent=51 // pred_check
          %p700 = pneg %p231
        $region78: #{rnn_sequence.1} parent=51 // pred_check_branch
          %702 = sbr.rel (%p700) target = $region80
        $region79: #{rnn_sequence.1} parent=51 // pred_region
          %703 = dma.done [#allocation7], 32
        $region80: #{rnn_sequence.1} parent=51 // pred_fallthru
          _
      $region52: #{rnn_sequence.1} parent=5 // pred_fallthru
        _
      %p704 = scmp.le.s32.totalorder 2, %s19
      // Predicated region
      $region81: #{rnn_sequence.1} parent=5 // pred_check
        %p705 = pneg %p704
      $region82: #{rnn_sequence.1} parent=5 // pred_check_branch
        %707 = sbr.rel (%p705) target = $region84
      $region83: #{rnn_sequence.1} parent=5 // pred_region
        %s708 = ssub.s32 %s19, 2
      $region84: #{rnn_sequence.1} parent=5 // pred_fallthru
        _
    $region6: #{rnn_sequence.1} parent=1 // loop_footer
      %s23 = sadd.s32 1, %s19
    $region7: #{rnn_sequence.1} parent=1 // loop_footer_branch
      %18 = sbr.rel target = $region3
    $region8: #{rnn_sequence.1} parent=1 // loop_exit
      _
    %709 = vsyncpa [#allocation3], 1
    %s710 = scalar_lea.sflag [#allocation3], 1
    %711 = vsyncpa %s710, 1
    %712 = vsyncpa [#allocation4], 1
    %s713 = scalar_lea.sflag [#allocation4], 1
    %714 = vsyncpa %s713, 1
    %715 = vsyncpa [#allocation7], 1

</llo_original>
